<compile_context>
chip_gen: v5e
topology: v5e:2x2
jax: 0.10.0
libtpu: 0.0.40
codegen_flags: <defaults>
</compile_context>

<pallas_src>
import functools

import jax
import jax.numpy as jnp
from jax.experimental import pallas as pl
from jax.experimental.pallas import tpu as pltpu


def _fused_mlp_kernel(*refs, n_layers):
    """Fused (Linear -> ReLU -> Dropout[identity])* -> Linear.

    refs = (x_ref, w_0, b_0, w_1, b_1, ..., w_{n-1}, b_{n-1}, o_ref)
    x / w are bf16, biases f32. Each matmul accumulates in f32 on the MXU,
    the bias-add / ReLU epilogue is f32, and the activation is cast back to
    bf16 only to feed the next MXU pass. Intermediates never leave VMEM/vregs.
    """
    x_ref = refs[0]
    o_ref = refs[1 + 2 * n_layers]

    h = x_ref[...]  # bf16 activations
    for i in range(n_layers):
        w_ref = refs[1 + 2 * i]
        b_ref = refs[2 + 2 * i]
        y = jnp.dot(h, w_ref[...], preferred_element_type=jnp.float32)
        y = y + b_ref[...]                       # f32 epilogue
        if i != n_layers - 1:
            y = jnp.maximum(y, 0.0)              # ReLU (f32)
            # Dropout: eval-mode -> identity.
            h = y.astype(jnp.bfloat16)           # bf16 for the next MXU pass
        else:
            o_ref[...] = y.astype(o_ref.dtype)   # single final store


def mlp_forward(params, x):
    """Whole-MLP forward pass as a single fused pallas_call."""
    n_layers = len(params)
    batch, d_in = x.shape
    d_out = params[-1][0].shape[1]

    # Cast activations/weights to bf16 at the call boundary (halves weight DMA
    # bytes, enables full-rate bf16 MXU); biases stay f32 for the f32 epilogue.
    x_bf16 = x.astype(jnp.bfloat16)
    inputs = [x_bf16]
    in_specs = [pl.BlockSpec((batch, d_in), lambda i: (0, 0))]

    flops = 0
    bytes_accessed = 2 * batch * d_in            # bf16 x
    for w, b in params:
        din, dout = w.shape
        inputs.append(w.astype(jnp.bfloat16))
        inputs.append(b.reshape(1, dout).astype(jnp.float32))
        in_specs.append(pl.BlockSpec((din, dout), lambda i: (0, 0)))
        in_specs.append(pl.BlockSpec((1, dout), lambda i: (0, 0)))
        flops += 2 * batch * din * dout
        bytes_accessed += 2 * din * dout + 4 * dout
    bytes_accessed += 4 * batch * d_out          # f32 output

    kernel = functools.partial(_fused_mlp_kernel, n_layers=n_layers)
    return pl.pallas_call(
        kernel,
        out_shape=jax.ShapeDtypeStruct((batch, d_out), jnp.float32),
        grid=(1,),
        in_specs=in_specs,
        out_specs=pl.BlockSpec((batch, d_out), lambda i: (0, 0)),
        compiler_params=pltpu.CompilerParams(
            dimension_semantics=("arbitrary",)
        ),
        cost_estimate=pl.CostEstimate(
            flops=flops, transcendentals=0, bytes_accessed=bytes_accessed
        ),
    )(*inputs)


def init_mlp_params(key, features_in, features_out, layer):
    """Deterministic parameter init (uniform, like PyTorch's default Linear init)."""
    params = []
    in_size = features_in
    dims = list(layer) + [features_out]
    for h in dims:
        key, kw, kb = jax.random.split(key, 3)
        bound = 1.0 / jnp.sqrt(in_size)
        # stored as [in, out]  (transpose of torch's [out, in])
        w = jax.random.uniform(kw, (in_size, h), jnp.float32, -bound, bound)
        b = jax.random.uniform(kb, (h,), jnp.float32, -bound, bound)
        params.append((w, b))
        in_size = h
    return params


if __name__ == "__main__":
    # small shapes: batch=8, features_in=32, hidden layers [64, 48], features_out=16
    features_in, features_out = 32, 16
    hidden = [64, 48]
    dropout = 0.1  # unused in eval-mode forward

    key = jax.random.PRNGKey(0)
    key, kx = jax.random.split(key)
    x = jax.random.normal(kx, (8, features_in), jnp.float32)

    params = init_mlp_params(key, features_in, features_out, hidden)

    out = mlp_forward(params, x)
    out = jax.block_until_ready(out)

    # Reference 1: same bf16-in / f32-accumulate math as the kernel.
    ref = x.astype(jnp.bfloat16)
    for i, (w, b) in enumerate(params):
        y = jnp.dot(ref, w.astype(jnp.bfloat16),
                    preferred_element_type=jnp.float32) + b
        if i != len(params) - 1:
            y = jnp.maximum(y, 0.0)
            ref = y.astype(jnp.bfloat16)
        else:
            ref = y

    # Reference 2: pure f32 math (sanity bound on bf16 rounding error).
    ref32 = x
    for i, (w, b) in enumerate(params):
        ref32 = ref32 @ w + b
        if i != len(params) - 1:
            ref32 = jnp.maximum(ref32, 0.0)

    assert out.shape == (8, features_out)
    assert jnp.allclose(out, ref, atol=2e-2, rtol=2e-2)
    assert jnp.allclose(out, ref32, atol=1e-1, rtol=1e-1)

    print("KERNEL_OK")
</pallas_src>

<mosaic_0001>
module attributes {stable_mosaic.version = 11 : i64} {
  func.func @_fused_mlp_kernel(%arg0: i32, %arg1: memref<8x32xbf16, #tpu.memory_space<vmem>>, %arg2: memref<32x64xbf16, #tpu.memory_space<vmem>>, %arg3: memref<1x64xf32, #tpu.memory_space<vmem>>, %arg4: memref<64x48xbf16, #tpu.memory_space<vmem>>, %arg5: memref<1x48xf32, #tpu.memory_space<vmem>>, %arg6: memref<48x16xbf16, #tpu.memory_space<vmem>>, %arg7: memref<1x16xf32, #tpu.memory_space<vmem>>, %arg8: memref<8x16xf32, #tpu.memory_space<vmem>>) attributes {dimension_semantics = [#tpu.dimension_semantics<arbitrary>], iteration_bounds = array<i64: 1>, scalar_prefetch = 0 : i64, scratch_operands = 0 : i64, tpu.core_type = #tpu.core_type<tc>, window_params = [{pipeline_mode = #tpu.pipeline_mode<synchronous>, transform_indices = @transform_0, window_bounds = array<i64: 8, 32>}, {pipeline_mode = #tpu.pipeline_mode<synchronous>, transform_indices = @transform_1, window_bounds = array<i64: 32, 64>}, {pipeline_mode = #tpu.pipeline_mode<synchronous>, transform_indices = @transform_2, window_bounds = array<i64: 1, 64>}, {pipeline_mode = #tpu.pipeline_mode<synchronous>, transform_indices = @transform_3, window_bounds = array<i64: 64, 48>}, {pipeline_mode = #tpu.pipeline_mode<synchronous>, transform_indices = @transform_4, window_bounds = array<i64: 1, 48>}, {pipeline_mode = #tpu.pipeline_mode<synchronous>, transform_indices = @transform_5, window_bounds = array<i64: 48, 16>}, {pipeline_mode = #tpu.pipeline_mode<synchronous>, transform_indices = @transform_6, window_bounds = array<i64: 1, 16>}, {pipeline_mode = #tpu.pipeline_mode<synchronous>, transform_indices = @transform_7, window_bounds = array<i64: 8, 16>}]} {
    %c0 = arith.constant 0 : index
    %c0_0 = arith.constant 0 : index
    %0 = vector.load %arg1[%c0, %c0_0] : memref<8x32xbf16, #tpu.memory_space<vmem>>, vector<8x32xbf16>
    %c0_1 = arith.constant 0 : index
    %c0_2 = arith.constant 0 : index
    %1 = vector.load %arg2[%c0_1, %c0_2] : memref<32x64xbf16, #tpu.memory_space<vmem>>, vector<32x64xbf16>
    %cst = arith.constant dense<0.000000e+00> : vector<8x64xf32>
    %2 = tpu.matmul %0, %1, %cst {dimension_numbers = #tpu.dot_dimension_numbers<[1], [0], [0], [1], [0, 0, 1, 1], [], []>} : vector<8x32xbf16>, vector<32x64xbf16>, vector<8x64xf32> -> vector<8x64xf32>
    %c0_3 = arith.constant 0 : index
    %c0_4 = arith.constant 0 : index
    %3 = vector.load %arg3[%c0_3, %c0_4] : memref<1x64xf32, #tpu.memory_space<vmem>>, vector<1x64xf32>
    %4 = vector.broadcast %3 : vector<1x64xf32> to vector<8x64xf32>
    %5 = arith.addf %2, %4 : vector<8x64xf32>
    %cst_5 = arith.constant 0.000000e+00 : f32
    %6 = vector.broadcast %cst_5 : f32 to vector<8x64xf32>
    %7 = arith.maximumf %5, %6 : vector<8x64xf32>
    %8 = arith.truncf %7 : vector<8x64xf32> to vector<8x64xbf16>
    %c0_6 = arith.constant 0 : index
    %c0_7 = arith.constant 0 : index
    %9 = vector.load %arg4[%c0_6, %c0_7] : memref<64x48xbf16, #tpu.memory_space<vmem>>, vector<64x48xbf16>
    %cst_8 = arith.constant dense<0.000000e+00> : vector<8x48xf32>
    %10 = tpu.matmul %8, %9, %cst_8 {dimension_numbers = #tpu.dot_dimension_numbers<[1], [0], [0], [1], [0, 0, 1, 1], [], []>} : vector<8x64xbf16>, vector<64x48xbf16>, vector<8x48xf32> -> vector<8x48xf32>
    %c0_9 = arith.constant 0 : index
    %c0_10 = arith.constant 0 : index
    %11 = vector.load %arg5[%c0_9, %c0_10] : memref<1x48xf32, #tpu.memory_space<vmem>>, vector<1x48xf32>
    %12 = vector.broadcast %11 : vector<1x48xf32> to vector<8x48xf32>
    %13 = arith.addf %10, %12 : vector<8x48xf32>
    %cst_11 = arith.constant 0.000000e+00 : f32
    %14 = vector.broadcast %cst_11 : f32 to vector<8x48xf32>
    %15 = arith.maximumf %13, %14 : vector<8x48xf32>
    %16 = arith.truncf %15 : vector<8x48xf32> to vector<8x48xbf16>
    %c0_12 = arith.constant 0 : index
    %c0_13 = arith.constant 0 : index
    %17 = vector.load %arg6[%c0_12, %c0_13] : memref<48x16xbf16, #tpu.memory_space<vmem>>, vector<48x16xbf16>
    %cst_14 = arith.constant dense<0.000000e+00> : vector<8x16xf32>
    %18 = tpu.matmul %16, %17, %cst_14 {dimension_numbers = #tpu.dot_dimension_numbers<[1], [0], [0], [1], [0, 0, 1, 1], [], []>} : vector<8x48xbf16>, vector<48x16xbf16>, vector<8x16xf32> -> vector<8x16xf32>
    %c0_15 = arith.constant 0 : index
    %c0_16 = arith.constant 0 : index
    %19 = vector.load %arg7[%c0_15, %c0_16] : memref<1x16xf32, #tpu.memory_space<vmem>>, vector<1x16xf32>
    %20 = vector.broadcast %19 : vector<1x16xf32> to vector<8x16xf32>
    %21 = arith.addf %18, %20 : vector<8x16xf32>
    %c0_17 = arith.constant 0 : index
    %c0_18 = arith.constant 0 : index
    %22 = vector.load %arg8[%c0_17, %c0_18] : memref<8x16xf32, #tpu.memory_space<vmem>>, vector<8x16xf32>
    tpu.vector_store %arg8[%c0_17, %c0_18], %21 {strides = array<i32>} : memref<8x16xf32, #tpu.memory_space<vmem>>, vector<8x16xf32>,
    return
  }
  func.func @transform_0(%arg0: i32) -> (i32, i32) {
    %c0_i32 = arith.constant 0 : i32
    %c0_i32_0 = arith.constant 0 : i32
    %c0_i32_1 = arith.constant 0 : i32
    return %c0_i32, %c0_i32_0 : i32, i32
  }
  func.func @transform_1(%arg0: i32) -> (i32, i32) {
    %c0_i32 = arith.constant 0 : i32
    %c0_i32_0 = arith.constant 0 : i32
    %c0_i32_1 = arith.constant 0 : i32
    return %c0_i32, %c0_i32_0 : i32, i32
  }
  func.func @transform_2(%arg0: i32) -> (i32, i32) {
    %c0_i32 = arith.constant 0 : i32
    %c0_i32_0 = arith.constant 0 : i32
    %c0_i32_1 = arith.constant 0 : i32
    return %c0_i32, %c0_i32_0 : i32, i32
  }
  func.func @transform_3(%arg0: i32) -> (i32, i32) {
    %c0_i32 = arith.constant 0 : i32
    %c0_i32_0 = arith.constant 0 : i32
    %c0_i32_1 = arith.constant 0 : i32
    return %c0_i32, %c0_i32_0 : i32, i32
  }
  func.func @transform_4(%arg0: i32) -> (i32, i32) {
    %c0_i32 = arith.constant 0 : i32
    %c0_i32_0 = arith.constant 0 : i32
    %c0_i32_1 = arith.constant 0 : i32
    return %c0_i32, %c0_i32_0 : i32, i32
  }
  func.func @transform_5(%arg0: i32) -> (i32, i32) {
    %c0_i32 = arith.constant 0 : i32
    %c0_i32_0 = arith.constant 0 : i32
    %c0_i32_1 = arith.constant 0 : i32
    return %c0_i32, %c0_i32_0 : i32, i32
  }
  func.func @transform_6(%arg0: i32) -> (i32, i32) {
    %c0_i32 = arith.constant 0 : i32
    %c0_i32_0 = arith.constant 0 : i32
    %c0_i32_1 = arith.constant 0 : i32
    return %c0_i32, %c0_i32_0 : i32, i32
  }
  func.func @transform_7(%arg0: i32) -> (i32, i32) {
    %c0_i32 = arith.constant 0 : i32
    %c0_i32_0 = arith.constant 0 : i32
    %c0_i32_1 = arith.constant 0 : i32
    return %c0_i32, %c0_i32_0 : i32, i32
  }
}

</mosaic_0001>

<llo_original>
// kernel: tpu_custom_call.1
$region0: #{tpu_custom_call.1}
  #allocation0 [shape = 'u32[]', space=smem, size = 0x4, offset = 0x4, fixed_abs, tag = 'smem constant byte address 0x4 - core index']
  #allocation1 [shape = 'u32[72,128]{1,0:T(1,128)}', space=vmem, size = 0x9000, scoped, tag = 'internal scratch']
  %s0 = inlined_call_operand.vmem [shape: bf16[8,32], index: 0, kind: input, shape index: {}]
  %s1 = inlined_call_operand.vmem [shape: bf16[32,64], index: 1, kind: input, shape index: {}]
  %s2 = inlined_call_operand.vmem [shape: f32[1,64], index: 2, kind: input, shape index: {}]
  %s3 = inlined_call_operand.vmem [shape: bf16[64,48], index: 3, kind: input, shape index: {}]
  %s4 = inlined_call_operand.vmem [shape: f32[1,48], index: 4, kind: input, shape index: {}]
  %s5 = inlined_call_operand.vmem [shape: bf16[48,16], index: 5, kind: input, shape index: {}]
  %s6 = inlined_call_operand.vmem [shape: f32[1,16], index: 6, kind: input, shape index: {}]
  %s7 = inlined_call_operand.hbm [shape: f32[8,16], index: 7, kind: output, shape index: {}]
  %s8 = sld [smem:[#allocation0]]
  $region38: #{tpu_custom_call.1} parent=0
    _
  %s10 = ssub.s32 1, %s8
  %s11 = scalar_select 0, %s10, %s8
  $region1: #{tpu_custom_call.1} parent=0
    #allocation2 [shape = 'u8[4096]{0}', space=vmem, size = 0x1000, scoped, tag = 'output window, operand 0, single buffered']
    #allocation3 [shape = 's32[1]{0}', space=sflag, size = 0x4, scoped, tag = 'scoped memory for tpu_custom_call.1']
    %12 = vsyncpa [#allocation3], 0
    // Predicated region
    $region2: #{tpu_custom_call.1} parent=1 // pred_check
      _
    $region3: #{tpu_custom_call.1} parent=1 // pred_check_branch
      %14 = sbr.rel (0) target = $region5
    $region4: #{tpu_custom_call.1} parent=1 // pred_region
      _
    $region5: #{tpu_custom_call.1} parent=1 // pred_fallthru
      _
    // Predicated region
    $region6: #{tpu_custom_call.1} parent=1 // pred_check
      _
    $region7: #{tpu_custom_call.1} parent=1 // pred_check_branch
      %16 = sbr.rel (0) target = $region9
    $region8: #{tpu_custom_call.1} parent=1 // pred_region
      _
    $region9: #{tpu_custom_call.1} parent=1 // pred_fallthru
      _
    // Predicated region
    $region10: #{tpu_custom_call.1} parent=1 // pred_check
      _
    $region11: #{tpu_custom_call.1} parent=1 // pred_check_branch
      %18 = sbr.rel (0) target = $region13
    $region12: #{tpu_custom_call.1} parent=1 // pred_region
      _
    $region13: #{tpu_custom_call.1} parent=1 // pred_fallthru
      _
    // Predicated region
    $region14: #{tpu_custom_call.1} parent=1 // pred_check
      _
    $region15: #{tpu_custom_call.1} parent=1 // pred_check_branch
      %20 = sbr.rel (0) target = $region17
    $region16: #{tpu_custom_call.1} parent=1 // pred_region
      _
    $region17: #{tpu_custom_call.1} parent=1 // pred_fallthru
      _
    // Predicated region
    $region18: #{tpu_custom_call.1} parent=1 // pred_check
      _
    $region19: #{tpu_custom_call.1} parent=1 // pred_check_branch
      %22 = sbr.rel (0) target = $region21
    $region20: #{tpu_custom_call.1} parent=1 // pred_region
      _
    $region21: #{tpu_custom_call.1} parent=1 // pred_fallthru
      _
    // Predicated region
    $region22: #{tpu_custom_call.1} parent=1 // pred_check
      _
    $region23: #{tpu_custom_call.1} parent=1 // pred_check_branch
      %24 = sbr.rel (0) target = $region25
    $region24: #{tpu_custom_call.1} parent=1 // pred_region
      _
    $region25: #{tpu_custom_call.1} parent=1 // pred_fallthru
      _
    // Predicated region
    $region26: #{tpu_custom_call.1} parent=1 // pred_check
      _
    $region27: #{tpu_custom_call.1} parent=1 // pred_check_branch
      %26 = sbr.rel (0) target = $region29
    $region28: #{tpu_custom_call.1} parent=1 // pred_region
      _
    $region29: #{tpu_custom_call.1} parent=1 // pred_fallthru
      _
    %v28 = vld [vmem:[%s0] sm:$0xf]
    %v29 = vld [vmem:[%s1] sm:$0xf]
    %v30 = vld [vmem:[%s1 + $0x4] sm:$0xf]
    %v31 = vld [vmem:[%s1 + $0x8] sm:$0xf]
    %v32 = vld [vmem:[%s1 + $0xc] sm:$0xf]
    %v33 = vld [vmem:[%s2] sm:$0x1]
    %v35 = vperm.slane %v33, 0
    %v41 = vunpack.c.l.b16 %v29
    %v42 = vunpack.c.l.b16 %v30
    %v43 = vunpack.c.l.b16 %v31
    %v44 = vunpack.c.l.b16 %v32
    %v45 = vpack.c.b16 %v42, %v41
    %v46 = vpack.c.b16 %v44, %v43
    %vm49 = vcmask 261120
    %v51 = vsel %vm49, %v28, 0
    %53 = vmatpush.bf16.msra.mxu0 0
    %54 = vmatpush.bf16.msra.mxu0 0
    %55 = vmatpush.bf16.msra.mxu0 0
    %56 = vmatpush.bf16.msra.mxu0 0
    %57 = vmatpush.bf16.msra.mxu0 0
    %58 = vmatpush.bf16.msra.mxu0 0
    %59 = vmatpush.bf16.msra.mxu0 %v46
    %60 = vmatpush.bf16.msra.mxu0 %v45
    %61 = vmatmul.bf16.gmra.mxu0 %v51
    %v62 = vpop.f32.mrf.mxu0
    %v63 = vadd.f32 %v35, %v62
    %v64 = vpop.f32.mrf.mxu0
    %65 = vdwg.mxu0
    %v66 = vmax.f32 %v63, 0.0
    %v67 = vpack.c.bf16 %v66, %v66
    %v68 = vld [vmem:[%s3] sm:$0xf]
    %v69 = vld [vmem:[%s3 + $0x4] sm:$0xf]
    %v70 = vld [vmem:[%s3 + $0x8] sm:$0xf]
    %v71 = vld [vmem:[%s3 + $0xc] sm:$0xf]
    %v72 = vld [vmem:[%s3 + $0x10] sm:$0xf]
    %v73 = vld [vmem:[%s3 + $0x14] sm:$0xf]
    %v74 = vld [vmem:[%s3 + $0x18] sm:$0xf]
    %v75 = vld [vmem:[%s3 + $0x1c] sm:$0xf]
    %v76 = vld [vmem:[%s4] sm:$0x1]
    %v78 = vperm.slane %v76, 0
    %v88 = vunpack.c.l.b16 %v68
    %v89 = vunpack.c.l.b16 %v69
    %v90 = vunpack.c.l.b16 %v70
    %v91 = vunpack.c.l.b16 %v71
    %v92 = vunpack.c.l.b16 %v72
    %v93 = vunpack.c.l.b16 %v73
    %v94 = vunpack.c.l.b16 %v74
    %v95 = vunpack.c.l.b16 %v75
    %v96 = vpack.c.b16 %v89, %v88
    %v97 = vpack.c.b16 %v91, %v90
    %v98 = vpack.c.b16 %v93, %v92
    %v99 = vpack.c.b16 %v95, %v94
    %vm104 = vcmask 523264
    %v106 = vsel %vm104, %v67, 0
    %108 = vmatpush.bf16.msra.mxu0 0
    %109 = vmatpush.bf16.msra.mxu0 0
    %110 = vmatpush.bf16.msra.mxu0 0
    %111 = vmatpush.bf16.msra.mxu0 0
    %112 = vmatpush.bf16.msra.mxu0 %v99
    %113 = vmatpush.bf16.msra.mxu0 %v98
    %114 = vmatpush.bf16.msra.mxu0 %v97
    %115 = vmatpush.bf16.msra.mxu0 %v96
    %116 = vmatmul.bf16.gmra.mxu0 %v106
    %v117 = vpop.f32.mrf.mxu0
    %v118 = vadd.f32 %v78, %v117
    %v119 = vpop.f32.mrf.mxu0
    %120 = vdwg.mxu0
    %v121 = vmax.f32 %v118, 0.0
    %v122 = vpack.c.bf16 %v121, %v121
    %v123 = vld [vmem:[%s5] sm:$0xf]
    %v124 = vld [vmem:[%s5 + $0x4] sm:$0xf]
    %v125 = vld [vmem:[%s5 + $0x8] sm:$0xf]
    %v126 = vld [vmem:[%s5 + $0xc] sm:$0xf]
    %v127 = vld [vmem:[%s5 + $0x10] sm:$0xf]
    %v128 = vld [vmem:[%s5 + $0x14] sm:$0xf]
    %v129 = vld [vmem:[%s6] sm:$0x1]
    %v131 = vperm.slane %v129, 0
    %v139 = vunpack.c.l.b16 %v123
    %v140 = vunpack.c.l.b16 %v124
    %v141 = vunpack.c.l.b16 %v125
    %v142 = vunpack.c.l.b16 %v126
    %v143 = vunpack.c.l.b16 %v127
    %v144 = vunpack.c.l.b16 %v128
    %v145 = vpack.c.b16 %v140, %v139
    %v146 = vpack.c.b16 %v142, %v141
    %v147 = vpack.c.b16 %v144, %v143
    %vm151 = vcmask 392192
    %v153 = vsel %vm151, %v122, 0
    %155 = vmatpush.bf16.msra.mxu0 0
    %156 = vmatpush.bf16.msra.mxu0 0
    %157 = vmatpush.bf16.msra.mxu0 0
    %158 = vmatpush.bf16.msra.mxu0 0
    %159 = vmatpush.bf16.msra.mxu0 0
    %160 = vmatpush.bf16.msra.mxu0 %v147
    %161 = vmatpush.bf16.msra.mxu0 %v146
    %162 = vmatpush.bf16.msra.mxu0 %v145
    %163 = vmatmul.bf16.gmra.mxu0 %v153
    %v164 = vpop.f32.mrf.mxu0
    %v165 = vadd.f32 %v131, %v164
    %v166 = vpop.f32.mrf.mxu0
    %167 = vdwg.mxu0
    %vm168 = vcmask 130048
    %169 = vst.msk [vmem:[#allocation2] sm:$0xff] %vm168, %v165
    // Predicated region
    $region30: #{tpu_custom_call.1} parent=1 // pred_check
      _
    $region31: #{tpu_custom_call.1} parent=1 // pred_check_branch
      %171 = sbr.rel (0) target = $region33
    $region32: #{tpu_custom_call.1} parent=1 // pred_region
      %173 = vsyncadd [#allocation3], 0
      %s175 = sshll.u32 [#allocation2], 4
      %s176 = int_to_ptr.vmem [resolvable:$true] %s175
      %s177 = sshll.u32 %s7, 4
      %s178 = int_to_ptr.hbm [resolvable:$true] %s177
      %180 = dma.vmem_to_hbm [thread:$0]  %s176, 128, %s178, [#allocation3]
    $region33: #{tpu_custom_call.1} parent=1 // pred_fallthru
      _
    // Predicated region
    $region34: #{tpu_custom_call.1} parent=1 // pred_check
      _
    $region35: #{tpu_custom_call.1} parent=1 // pred_check_branch
      %182 = sbr.rel (0) target = $region37
    $region36: #{tpu_custom_call.1} parent=1 // pred_region
      %184 = dma.done [#allocation3], 128
    $region37: #{tpu_custom_call.1} parent=1 // pred_fallthru
      _
    %185 = vsyncpa [#allocation3], 1

</llo_original>
